<compile_context>
chip_gen: v7x
topology: tpu7x:2x2x1
jax: 0.10.0
libtpu: 0.0.40
codegen_flags: <defaults>
</compile_context>

<pallas_src>
import functools

import jax
import jax.numpy as jnp
from jax.experimental import pallas as pl
from jax.experimental.pallas import tpu as pltpu


def _ls_ce_kernel(preds_ref, target_ref, out_ref,
                  smooth_acc, nll_acc, cnt_acc,
                  *, epsilon, ignore_index, n_rows, n_classes, tile_n):
    """One row-tile of the label-smoothing cross-entropy reduction."""
    i = pl.program_id(0)

    @pl.when(i == 0)
    def _init():
        smooth_acc[...] = jnp.zeros_like(smooth_acc)
        nll_acc[...] = jnp.zeros_like(nll_acc)
        cnt_acc[...] = jnp.zeros_like(cnt_acc)

    x = preds_ref[...].astype(jnp.float32)                    # (tile_n, C)
    t = target_ref[...]                                       # (tile_n, 1) int32

    # Mask rows beyond the true batch size (padded tail tile).
    row_local = jax.lax.broadcasted_iota(jnp.int32, (tile_n, 1), 0)
    row_global = i * tile_n + row_local
    in_bounds = row_global < n_rows                           # (tile_n, 1)

    # log-sum-exp pieces; logp is never materialized.
    m = jnp.max(x, axis=-1, keepdims=True)                    # (tile_n, 1)
    lse = jnp.log(jnp.sum(jnp.exp(x - m), axis=-1, keepdims=True))
    logz = m + lse                                            # log partition
    row_sum_x = jnp.sum(x, axis=-1, keepdims=True)            # (tile_n, 1)

    # Smoothing term per row: -sum_c log_softmax = C*logz - sum_c x
    smooth_row = n_classes * logz - row_sum_x                 # (tile_n, 1)
    smooth_row = jnp.where(in_bounds, smooth_row, 0.0)

    # NLL term per row: -logp[i, t[i]] = logz - x[i, t[i]]
    cls = jax.lax.broadcasted_iota(jnp.int32, x.shape, 1)     # (tile_n, C)
    picked_x = jnp.sum(jnp.where(cls == t, x, 0.0), axis=-1, keepdims=True)
    valid = in_bounds & (t != ignore_index)                   # (tile_n, 1)
    nll_row = jnp.where(valid, logz - picked_x, 0.0)

    smooth_acc[...] += jnp.sum(smooth_row, axis=0, keepdims=True)
    nll_acc[...] += jnp.sum(nll_row, axis=0, keepdims=True)
    cnt_acc[...] += jnp.sum(valid.astype(jnp.float32), axis=0, keepdims=True)

    @pl.when(i == pl.num_programs(0) - 1)
    def _finalize():
        smooth_mean = smooth_acc[...] / (n_rows * n_classes)
        # NOTE: if every target == ignore_index, cnt is 0 and this is NaN,
        # matching torch.nn.functional.nll_loss(reduction='mean').
        nll_mean = nll_acc[...] / cnt_acc[...]
        out_ref[...] = epsilon * smooth_mean + (1.0 - epsilon) * nll_mean


def _pick_tile_n(n_rows, n_classes, itemsize, budget_bytes):
    """Largest row tile whose double-buffered input fits the VMEM budget."""
    max_rows = budget_bytes // (2 * n_classes * itemsize)
    if max_rows >= n_rows:
        return n_rows                      # single tile, equal to full dim
    tile = max(16, (max_rows // 16) * 16)  # multiple of 16 (bf16 sublanes)
    return int(min(tile, n_rows))


def label_smoothing_cross_entropy(preds, target, *, epsilon=0.1,
                                  ignore_index=-100, tile_n=None,
                                  vmem_budget_bytes=12 * 1024 * 1024):
    """Pallas implementation of LabelSmoothingCrossEntropy(reduction='mean')."""
    N, C = preds.shape
    target2d = target.reshape(N, 1).astype(jnp.int32)

    if tile_n is None:
        tile_n = _pick_tile_n(N, C, jnp.dtype(preds.dtype).itemsize,
                              vmem_budget_bytes)
    tile_n = int(tile_n)
    num_tiles = pl.cdiv(N, tile_n)

    kernel = functools.partial(
        _ls_ce_kernel,
        epsilon=float(epsilon),
        ignore_index=int(ignore_index),
        n_rows=int(N),
        n_classes=float(C),
        tile_n=tile_n,
    )

    out = pl.pallas_call(
        kernel,
        out_shape=jax.ShapeDtypeStruct((1, 1), jnp.float32),
        grid_spec=pltpu.PrefetchScalarGridSpec(
            num_scalar_prefetch=0,
            grid=(num_tiles,),
            in_specs=[
                pl.BlockSpec((tile_n, C), lambda i: (i, 0)),
                pl.BlockSpec((tile_n, 1), lambda i: (i, 0)),
            ],
            out_specs=pl.BlockSpec((1, 1), lambda i: (0, 0)),
            scratch_shapes=[
                pltpu.VMEM((1, 1), jnp.float32),   # smoothing-term running sum
                pltpu.VMEM((1, 1), jnp.float32),   # NLL running sum
                pltpu.VMEM((1, 1), jnp.float32),   # valid-target count
            ],
        ),
        compiler_params=pltpu.CompilerParams(
            dimension_semantics=("arbitrary",),    # grid axis is a reduction
        ),
    )(preds, target2d)
    return out[0, 0]


def _reference(preds, target, epsilon=0.1, ignore_index=-100):
    """Pure-JAX mirror of the PyTorch module (reduction='mean')."""
    n = preds.shape[-1]
    logp = jax.nn.log_softmax(preds.astype(jnp.float32), axis=-1)
    loss = jnp.mean(-jnp.sum(logp, axis=-1))
    valid = target != ignore_index
    safe_t = jnp.where(valid, target, 0)
    picked = jnp.take_along_axis(logp, safe_t[:, None], axis=-1)[:, 0]
    nll = jnp.sum(jnp.where(valid, -picked, 0.0)) / jnp.sum(valid)
    return epsilon * (loss / n) + (1.0 - epsilon) * nll


if __name__ == "__main__":
    key = jax.random.PRNGKey(0)
    k1, k2 = jax.random.split(key)

    N, C = 24, 128
    preds = jax.random.normal(k1, (N, C), dtype=jnp.float32)
    target = jax.random.randint(k2, (N,), 0, C, dtype=jnp.int32)
    # include ignored labels to exercise ignore_index masking
    target = target.at[3].set(-100)
    target = target.at[17].set(-100)

    ref = _reference(preds, target)

    # 1) auto tile selection (single tile here, whole array in VMEM)
    out_single = label_smoothing_cross_entropy(preds, target, epsilon=0.1,
                                               ignore_index=-100)
    out_single = jax.block_until_ready(out_single)
    assert jnp.allclose(out_single, ref, rtol=1e-5, atol=1e-5), (out_single, ref)

    # 2) forced multi-tile path with a padded tail tile (N=24, tile_n=16)
    out_tiled = label_smoothing_cross_entropy(preds, target, epsilon=0.1,
                                              ignore_index=-100, tile_n=16)
    out_tiled = jax.block_until_ready(out_tiled)
    assert jnp.allclose(out_tiled, ref, rtol=1e-5, atol=1e-5), (out_tiled, ref)

    print("KERNEL_OK")
</pallas_src>

<mosaic_0001>
module attributes {stable_mosaic.version = 11 : i64} {
  func.func @_ls_ce_kernel(%arg0: i32, %arg1: memref<24x128xf32, #tpu.memory_space<vmem>>, %arg2: memref<24x1xi32, #tpu.memory_space<vmem>>, %arg3: memref<1x1xf32, #tpu.memory_space<vmem>>, %arg4: memref<1x1xf32, #tpu.memory_space<vmem>>, %arg5: memref<1x1xf32, #tpu.memory_space<vmem>>, %arg6: memref<1x1xf32, #tpu.memory_space<vmem>>) attributes {dimension_semantics = [#tpu.dimension_semantics<arbitrary>], iteration_bounds = array<i64: 1>, scalar_prefetch = 0 : i64, scratch_operands = 3 : i64, tpu.core_type = #tpu.core_type<tc>, window_params = [{transform_indices = @transform_0, window_bounds = array<i64: 24, 128>}, {transform_indices = @transform_1, window_bounds = array<i64: 24, 1>}, {pipeline_mode = #tpu.pipeline_mode<synchronous>, transform_indices = @transform_2, window_bounds = array<i64: 1, 1>}]} {
    %c0_i32 = arith.constant 0 : i32
    %0 = arith.cmpi eq, %arg0, %c0_i32 : i32
    %1 = arith.extui %0 : i1 to i32
    %c0_i32_0 = arith.constant 0 : i32
    %2 = arith.cmpi ne, %1, %c0_i32_0 : i32
    scf.if %2 {
      %cst_29 = arith.constant 0.000000e+00 : f32
      %60 = vector.broadcast %cst_29 : f32 to vector<1x1xf32>
      %c0_30 = arith.constant 0 : index
      %c0_31 = arith.constant 0 : index
      %61 = vector.load %arg4[%c0_30, %c0_31] : memref<1x1xf32, #tpu.memory_space<vmem>>, vector<1x1xf32>
      tpu.vector_store %arg4[%c0_30, %c0_31], %60 {strides = array<i32>} : memref<1x1xf32, #tpu.memory_space<vmem>>, vector<1x1xf32>,
      %cst_32 = arith.constant 0.000000e+00 : f32
      %62 = vector.broadcast %cst_32 : f32 to vector<1x1xf32>
      %c0_33 = arith.constant 0 : index
      %c0_34 = arith.constant 0 : index
      %63 = vector.load %arg5[%c0_33, %c0_34] : memref<1x1xf32, #tpu.memory_space<vmem>>, vector<1x1xf32>
      tpu.vector_store %arg5[%c0_33, %c0_34], %62 {strides = array<i32>} : memref<1x1xf32, #tpu.memory_space<vmem>>, vector<1x1xf32>,
      %cst_35 = arith.constant 0.000000e+00 : f32
      %64 = vector.broadcast %cst_35 : f32 to vector<1x1xf32>
      %c0_36 = arith.constant 0 : index
      %c0_37 = arith.constant 0 : index
      %65 = vector.load %arg6[%c0_36, %c0_37] : memref<1x1xf32, #tpu.memory_space<vmem>>, vector<1x1xf32>
      tpu.vector_store %arg6[%c0_36, %c0_37], %64 {strides = array<i32>} : memref<1x1xf32, #tpu.memory_space<vmem>>, vector<1x1xf32>,
    } else {
    }
    %c0 = arith.constant 0 : index
    %c0_1 = arith.constant 0 : index
    %3 = vector.load %arg1[%c0, %c0_1] : memref<24x128xf32, #tpu.memory_space<vmem>>, vector<24x128xf32>
    %c0_2 = arith.constant 0 : index
    %c0_3 = arith.constant 0 : index
    %4 = vector.load %arg2[%c0_2, %c0_3] : memref<24x1xi32, #tpu.memory_space<vmem>>, vector<24x1xi32>
    %5 = tpu.iota {dimensions = array<i32: 0>} : vector<24x1xi32>
    %c24_i32 = arith.constant 24 : i32
    %6 = arith.muli %arg0, %c24_i32 : i32
    %7 = vector.broadcast %6 : i32 to vector<24x1xi32>
    %8 = arith.addi %7, %5 : vector<24x1xi32>
    %c24_i32_4 = arith.constant 24 : i32
    %9 = vector.broadcast %c24_i32_4 : i32 to vector<24x1xi32>
    %10 = arith.cmpi slt, %8, %9 : vector<24x1xi32>
    %cst = arith.constant dense<0xFF800000> : vector<24xf32>
    %11 = vector.multi_reduction <maximumf>, %3, %cst [1] : vector<24x128xf32> to vector<24xf32>
    %12 = vector.shape_cast %11 : vector<24xf32> to vector<24x1xf32>
    %13 = vector.broadcast %12 : vector<24x1xf32> to vector<24x128xf32>
    %14 = arith.subf %3, %13 : vector<24x128xf32>
    %15 = math.exp %14 : vector<24x128xf32>
    %cst_5 = arith.constant dense<0.000000e+00> : vector<24xf32>
    %16 = vector.multi_reduction <add>, %15, %cst_5 [1] : vector<24x128xf32> to vector<24xf32>
    %17 = vector.shape_cast %16 : vector<24xf32> to vector<24x1xf32>
    %18 = math.log %17 : vector<24x1xf32>
    %19 = arith.addf %12, %18 : vector<24x1xf32>
    %cst_6 = arith.constant dense<0.000000e+00> : vector<24xf32>
    %20 = vector.multi_reduction <add>, %3, %cst_6 [1] : vector<24x128xf32> to vector<24xf32>
    %21 = vector.shape_cast %20 : vector<24xf32> to vector<24x1xf32>
    %cst_7 = arith.constant 1.280000e+02 : f32
    %22 = vector.broadcast %cst_7 : f32 to vector<24x1xf32>
    %23 = arith.mulf %22, %19 : vector<24x1xf32>
    %24 = arith.subf %23, %21 : vector<24x1xf32>
    %cst_8 = arith.constant 0.000000e+00 : f32
    %25 = vector.broadcast %cst_8 : f32 to vector<24x1xf32>
    %26 = arith.select %10, %24, %25 : vector<24x1xi1>, vector<24x1xf32>
    %27 = tpu.iota {dimensions = array<i32: 1>} : vector<24x128xi32>
    %28 = vector.broadcast %4 : vector<24x1xi32> to vector<24x128xi32>
    %29 = arith.cmpi eq, %27, %28 : vector<24x128xi32>
    %cst_9 = arith.constant 0.000000e+00 : f32
    %30 = vector.broadcast %cst_9 : f32 to vector<24x128xf32>
    %31 = arith.select %29, %3, %30 : vector<24x128xi1>, vector<24x128xf32>
    %cst_10 = arith.constant dense<0.000000e+00> : vector<24xf32>
    %32 = vector.multi_reduction <add>, %31, %cst_10 [1] : vector<24x128xf32> to vector<24xf32>
    %33 = vector.shape_cast %32 : vector<24xf32> to vector<24x1xf32>
    %c-100_i32 = arith.constant -100 : i32
    %34 = vector.broadcast %c-100_i32 : i32 to vector<24x1xi32>
    %35 = arith.cmpi ne, %4, %34 : vector<24x1xi32>
    %36 = arith.andi %10, %35 : vector<24x1xi1>
    %37 = arith.subf %19, %33 : vector<24x1xf32>
    %cst_11 = arith.constant 0.000000e+00 : f32
    %38 = vector.broadcast %cst_11 : f32 to vector<24x1xf32>
    %39 = arith.select %36, %37, %38 : vector<24x1xi1>, vector<24x1xf32>
    %c0_12 = arith.constant 0 : index
    %c0_13 = arith.constant 0 : index
    %40 = vector.load %arg4[%c0_12, %c0_13] : memref<1x1xf32, #tpu.memory_space<vmem>>, vector<1x1xf32>
    %cst_14 = arith.constant dense<0.000000e+00> : vector<1xf32>
    %41 = vector.multi_reduction <add>, %26, %cst_14 [0] : vector<24x1xf32> to vector<1xf32>
    %42 = vector.shape_cast %41 : vector<1xf32> to vector<1x1xf32>
    %43 = arith.addf %40, %42 : vector<1x1xf32>
    %c0_15 = arith.constant 0 : index
    %c0_16 = arith.constant 0 : index
    %44 = vector.load %arg4[%c0_15, %c0_16] : memref<1x1xf32, #tpu.memory_space<vmem>>, vector<1x1xf32>
    tpu.vector_store %arg4[%c0_15, %c0_16], %43 {strides = array<i32>} : memref<1x1xf32, #tpu.memory_space<vmem>>, vector<1x1xf32>,
    %c0_17 = arith.constant 0 : index
    %c0_18 = arith.constant 0 : index
    %45 = vector.load %arg5[%c0_17, %c0_18] : memref<1x1xf32, #tpu.memory_space<vmem>>, vector<1x1xf32>
    %cst_19 = arith.constant dense<0.000000e+00> : vector<1xf32>
    %46 = vector.multi_reduction <add>, %39, %cst_19 [0] : vector<24x1xf32> to vector<1xf32>
    %47 = vector.shape_cast %46 : vector<1xf32> to vector<1x1xf32>
    %48 = arith.addf %45, %47 : vector<1x1xf32>
    %c0_20 = arith.constant 0 : index
    %c0_21 = arith.constant 0 : index
    %49 = vector.load %arg5[%c0_20, %c0_21] : memref<1x1xf32, #tpu.memory_space<vmem>>, vector<1x1xf32>
    tpu.vector_store %arg5[%c0_20, %c0_21], %48 {strides = array<i32>} : memref<1x1xf32, #tpu.memory_space<vmem>>, vector<1x1xf32>,
    %c0_22 = arith.constant 0 : index
    %c0_23 = arith.constant 0 : index
    %50 = vector.load %arg6[%c0_22, %c0_23] : memref<1x1xf32, #tpu.memory_space<vmem>>, vector<1x1xf32>
    %51 = arith.extui %36 : vector<24x1xi1> to vector<24x1xi32>
    %52 = arith.sitofp %51 : vector<24x1xi32> to vector<24x1xf32>
    %cst_24 = arith.constant dense<0.000000e+00> : vector<1xf32>
    %53 = vector.multi_reduction <add>, %52, %cst_24 [0] : vector<24x1xf32> to vector<1xf32>
    %54 = vector.shape_cast %53 : vector<1xf32> to vector<1x1xf32>
    %55 = arith.addf %50, %54 : vector<1x1xf32>
    %c0_25 = arith.constant 0 : index
    %c0_26 = arith.constant 0 : index
    %56 = vector.load %arg6[%c0_25, %c0_26] : memref<1x1xf32, #tpu.memory_space<vmem>>, vector<1x1xf32>
    tpu.vector_store %arg6[%c0_25, %c0_26], %55 {strides = array<i32>} : memref<1x1xf32, #tpu.memory_space<vmem>>, vector<1x1xf32>,
    %c0_i32_27 = arith.constant 0 : i32
    %57 = arith.cmpi eq, %arg0, %c0_i32_27 : i32
    %58 = arith.extui %57 : i1 to i32
    %c0_i32_28 = arith.constant 0 : i32
    %59 = arith.cmpi ne, %58, %c0_i32_28 : i32
    scf.if %59 {
      %c0_29 = arith.constant 0 : index
      %c0_30 = arith.constant 0 : index
      %60 = vector.load %arg4[%c0_29, %c0_30] : memref<1x1xf32, #tpu.memory_space<vmem>>, vector<1x1xf32>
      %cst_31 = arith.constant 3.072000e+03 : f32
      %61 = vector.broadcast %cst_31 : f32 to vector<1x1xf32>
      %62 = arith.divf %60, %61 : vector<1x1xf32>
      %c0_32 = arith.constant 0 : index
      %c0_33 = arith.constant 0 : index
      %63 = vector.load %arg5[%c0_32, %c0_33] : memref<1x1xf32, #tpu.memory_space<vmem>>, vector<1x1xf32>
      %c0_34 = arith.constant 0 : index
      %c0_35 = arith.constant 0 : index
      %64 = vector.load %arg6[%c0_34, %c0_35] : memref<1x1xf32, #tpu.memory_space<vmem>>, vector<1x1xf32>
      %65 = arith.divf %63, %64 : vector<1x1xf32>
      %cst_36 = arith.constant 1.000000e-01 : f32
      %66 = vector.broadcast %cst_36 : f32 to vector<1x1xf32>
      %67 = arith.mulf %66, %62 : vector<1x1xf32>
      %cst_37 = arith.constant 0.899999976 : f32
      %68 = vector.broadcast %cst_37 : f32 to vector<1x1xf32>
      %69 = arith.mulf %68, %65 : vector<1x1xf32>
      %70 = arith.addf %67, %69 : vector<1x1xf32>
      %c0_38 = arith.constant 0 : index
      %c0_39 = arith.constant 0 : index
      %71 = vector.load %arg3[%c0_38, %c0_39] : memref<1x1xf32, #tpu.memory_space<vmem>>, vector<1x1xf32>
      tpu.vector_store %arg3[%c0_38, %c0_39], %70 {strides = array<i32>} : memref<1x1xf32, #tpu.memory_space<vmem>>, vector<1x1xf32>,
    } else {
    }
    return
  }
  func.func @transform_0(%arg0: i32) -> (i32, i32) {
    %c0_i32 = arith.constant 0 : i32
    %c0_i32_0 = arith.constant 0 : i32
    return %arg0, %c0_i32 : i32, i32
  }
  func.func @transform_1(%arg0: i32) -> (i32, i32) {
    %c0_i32 = arith.constant 0 : i32
    %c0_i32_0 = arith.constant 0 : i32
    return %arg0, %c0_i32 : i32, i32
  }
  func.func @transform_2(%arg0: i32) -> (i32, i32) {
    %c0_i32 = arith.constant 0 : i32
    %c0_i32_0 = arith.constant 0 : i32
    %c0_i32_1 = arith.constant 0 : i32
    return %c0_i32, %c0_i32_0 : i32, i32
  }
}

</mosaic_0001>

<llo_original>
// kernel: tpu_custom_call.1
$region0: #{tpu_custom_call.1}
  #allocation0 [shape = 'u32[]', space=smem, size = 0x4, offset = 0x4, fixed_abs, tag = 'smem constant byte address 0x4 - core index']
  #allocation1 [shape = 'u32[144,128]{1,0:T(1,128)}', space=vmem, size = 0x12000, scoped, tag = 'internal scratch']
  #allocation2 [shape = 'f32[1,1]{1,0:T(1,128)}', space=vmem, size = 0x200, scoped, tag = 'scratch operand']
  #allocation3 [shape = 'f32[1,1]{1,0:T(1,128)}', space=vmem, size = 0x200, scoped, tag = 'scratch operand']
  #allocation4 [shape = 'f32[1,1]{1,0:T(1,128)}', space=vmem, size = 0x200, scoped, tag = 'scratch operand']
  %s0 = inlined_call_operand.vmem [shape: f32[24,128], index: 0, kind: input, shape index: {}]
  %s1 = inlined_call_operand.vmem [shape: s32[24,1], index: 1, kind: input, shape index: {}]
  %s2 = inlined_call_operand.hbm [shape: f32[1,1], index: 2, kind: output, shape index: {}]
  %s3 = sld [smem:[#allocation0]]
  $region26: #{tpu_custom_call.1} parent=0
    _
  %s5 = ssub.s32 1, %s3
  %s6 = scalar_select 0, %s5, %s3
  $region1: #{tpu_custom_call.1} parent=0
    #allocation5 [shape = 'u8[512]{0}', space=vmem, size = 0x400, scoped, tag = 'output window, operand 0, single buffered']
    #allocation6 [shape = 's32[1]{0}', space=sflag, size = 0x4, scoped, tag = 'scoped memory for tpu_custom_call.1']
    %7 = vsyncpa [#allocation6], 0
    // Predicated region
    $region2: #{tpu_custom_call.1} parent=1 // pred_check
      _
    $region3: #{tpu_custom_call.1} parent=1 // pred_check_branch
      %9 = sbr.rel (0) target = $region5
    $region4: #{tpu_custom_call.1} parent=1 // pred_region
      _
    $region5: #{tpu_custom_call.1} parent=1 // pred_fallthru
      _
    // Predicated region
    $region6: #{tpu_custom_call.1} parent=1 // pred_check
      _
    $region7: #{tpu_custom_call.1} parent=1 // pred_check_branch
      %11 = sbr.rel (0) target = $region9
    $region8: #{tpu_custom_call.1} parent=1 // pred_region
      _
    $region9: #{tpu_custom_call.1} parent=1 // pred_fallthru
      _
    %p12 = scmp.eq.s32.totalorder 0, 0
    // Predicated region
    $region10: #{tpu_custom_call.1} parent=1 // pred_check
      %p13 = pneg %p12
    $region11: #{tpu_custom_call.1} parent=1 // pred_check_branch
      %15 = sbr.rel (%p13) target = $region13
    $region12: #{tpu_custom_call.1} parent=1 // pred_region
      %vm16 = vcmask 0
      %17 = vst.msk [vmem:[#allocation2] sm:$0x1] %vm16, 0.0
      %18 = vst.msk [vmem:[#allocation3] sm:$0x1] %vm16, 0.0
      %19 = vst.msk [vmem:[#allocation4] sm:$0x1] %vm16, 0.0
    $region13: #{tpu_custom_call.1} parent=1 // pred_fallthru
      _
    %v20 = vld [vmem:[%s0] sm:$0xff]
    %v21 = vld [vmem:[%s0 + $0x8] sm:$0xff]
    %v22 = vld [vmem:[%s0 + $0x10] sm:$0xff]
    %v23 = vld [vmem:[%s1] sm:$0xff]
    %v24 = vld [vmem:[%s1 + $0x8] sm:$0xff]
    %v25 = vld [vmem:[%s1 + $0x10] sm:$0xff]
    %v26 = vlaneseq
    %v27 = vshrl.u32 %v26, 7
    %v28 = vadd.s32 %v27, 8
    %v29 = vadd.s32 %v27, 16
    %s30 = smul.u32 0, 24
    %v31 = vstv %s30
    %v32 = vadd.s32 %v31, %v27
    %v33 = vadd.s32 %v31, %v28
    %v34 = vadd.s32 %v31, %v29
    %vm35 = vcmp.lt.s32.totalorder %v32, 24
    %vm36 = vcmp.lt.s32.totalorder %v33, 24
    %vm37 = vcmp.lt.s32.totalorder %v34, 24
    %38 = vmax.xlane.f32.xlu0 %v20
    %v39 = vpop.xlane.xlu0 %38
    %40 = vmax.xlane.f32.xlu0 %v21
    %v41 = vpop.xlane.xlu0 %40
    %42 = vmax.xlane.f32.xlu0 %v22
    %v43 = vpop.xlane.xlu0 %42
    %v44 = vsub.f32 %v20, %v39
    %v45 = vsub.f32 %v21, %v41
    %v46 = vsub.f32 %v22, %v43
    %v47 = vmul.f32 %v44, 1.442695
    %v48 = vpow.pop %v47
    %v49 = vmul.f32 %v45, 1.442695
    %v50 = vpow.pop %v49
    %v51 = vmul.f32 %v46, 1.442695
    %v52 = vpow.pop %v51
    %53 = vadd.xlane.f32.xlu0 %v48
    %v54 = vpop.xlane.xlu0 %53
    %55 = vadd.xlane.f32.xlu0 %v50
    %v56 = vpop.xlane.xlu0 %55
    %57 = vadd.xlane.f32.xlu0 %v52
    %v58 = vpop.xlane.xlu0 %57
    %v59 = vlog2.pop %v54
    %v60 = vmul.f32 %v59, 0.6931472
    %v61 = vlog2.pop %v56
    %v62 = vmul.f32 %v61, 0.6931472
    %v63 = vlog2.pop %v58
    %v64 = vmul.f32 %v63, 0.6931472
    %v65 = vadd.f32 %v39, %v60
    %v66 = vadd.f32 %v41, %v62
    %v67 = vadd.f32 %v43, %v64
    %68 = vadd.xlane.f32.xlu0 %v20
    %v69 = vpop.xlane.xlu0 %68
    %70 = vadd.xlane.f32.xlu0 %v21
    %v71 = vpop.xlane.xlu0 %70
    %72 = vadd.xlane.f32.xlu0 %v22
    %v73 = vpop.xlane.xlu0 %72
    %v74 = vmul.f32 %v65, 128.0
    %v75 = vmul.f32 %v66, 128.0
    %v76 = vmul.f32 %v67, 128.0
    %v77 = vsub.f32 %v74, %v69
    %v78 = vsub.f32 %v75, %v71
    %v79 = vsub.f32 %v76, %v73
    %v80 = vsel %vm35, %v77, 0.0
    %v81 = vsel %vm36, %v78, 0.0
    %v82 = vsel %vm37, %v79, 0.0
    %v83 = vlaneseq
    %v84 = vand.u32 %v83, 127
    %85 = vset.pattern.permute.xlu0 0
    %86 = vperm.xlu0 %85, %v23
    %v87 = vpop.permute.xlu0 %86
    %88 = vset.pattern.permute.xlu0 0
    %89 = vperm.xlu0 %88, %v24
    %v90 = vpop.permute.xlu0 %89
    %91 = vset.pattern.permute.xlu0 0
    %92 = vperm.xlu0 %91, %v25
    %v93 = vpop.permute.xlu0 %92
    %vm94 = vcmp.eq.s32.totalorder %v84, %v87
    %vm95 = vcmp.eq.s32.totalorder %v84, %v90
    %vm96 = vcmp.eq.s32.totalorder %v84, %v93
    %v97 = vsel %vm94, %v20, 0.0
    %v98 = vsel %vm95, %v21, 0.0
    %v99 = vsel %vm96, %v22, 0.0
    %100 = vadd.xlane.f32.xlu0 %v97
    %v101 = vpop.xlane.xlu0 %100
    %102 = vadd.xlane.f32.xlu0 %v98
    %v103 = vpop.xlane.xlu0 %102
    %104 = vadd.xlane.f32.xlu0 %v99
    %v105 = vpop.xlane.xlu0 %104
    %vm106 = vcmp.ne.s32.totalorder %v23, 4294967196
    %vm107 = vcmp.ne.s32.totalorder %v24, 4294967196
    %vm108 = vcmp.ne.s32.totalorder %v25, 4294967196
    %vm109 = vmand %vm35, %vm106
    %vm110 = vmand %vm36, %vm107
    %vm111 = vmand %vm37, %vm108
    %v112 = vsub.f32 %v65, %v101
    %v113 = vsub.f32 %v66, %v103
    %v114 = vsub.f32 %v67, %v105
    %v115 = vsel %vm109, %v112, 0.0
    %v116 = vsel %vm110, %v113, 0.0
    %v117 = vsel %vm111, %v114, 0.0
    %v118 = vld [vmem:[#allocation2] sm:$0x1]
    %v119 = vadd.f32 %v80, %v81
    %v120 = vadd.f32 %v119, %v82
    %v121 = vrot.slane %v120, 4
    %v122 = vadd.f32 %v120, %v121
    %v123 = vrot.slane %v122, 2
    %v124 = vadd.f32 %v122, %v123
    %v125 = vrot.slane %v124, 1
    %v126 = vadd.f32 %v124, %v125
    %v127 = vadd.f32 %v118, %v126
    %vm128 = vcmask 0
    %129 = vst.msk [vmem:[#allocation2] sm:$0x1] %vm128, %v127
    %v130 = vld [vmem:[#allocation3] sm:$0x1]
    %vm131 = vcmask 7168
    %v132 = vsel %vm131, %v115, 0.0
    %v133 = vsel %vm131, %v116, 0.0
    %v134 = vadd.f32 %v132, %v133
    %v135 = vsel %vm131, %v117, 0.0
    %v136 = vadd.f32 %v134, %v135
    %v137 = vrot.slane %v136, 4
    %v138 = vadd.f32 %v136, %v137
    %v139 = vrot.slane %v138, 2
    %v140 = vadd.f32 %v138, %v139
    %v141 = vrot.slane %v140, 1
    %v142 = vadd.f32 %v140, %v141
    %v143 = vadd.f32 %v130, %v142
    %144 = vst.msk [vmem:[#allocation3] sm:$0x1] %vm128, %v143
    %v145 = vld [vmem:[#allocation4] sm:$0x1]
    %v146 = vsel %vm109, 1, 0
    %v147 = vsel %vm110, 1, 0
    %v148 = vsel %vm111, 1, 0
    %v149 = vcvt.s32.f32 %v146
    %v150 = vcvt.s32.f32 %v147
    %v151 = vcvt.s32.f32 %v148
    %v152 = vsel %vm131, %v149, 0.0
    %v153 = vsel %vm131, %v150, 0.0
    %v154 = vadd.f32 %v152, %v153
    %v155 = vsel %vm131, %v151, 0.0
    %v156 = vadd.f32 %v154, %v155
    %v157 = vrot.slane %v156, 4
    %v158 = vadd.f32 %v156, %v157
    %v159 = vrot.slane %v158, 2
    %v160 = vadd.f32 %v158, %v159
    %v161 = vrot.slane %v160, 1
    %v162 = vadd.f32 %v160, %v161
    %v163 = vadd.f32 %v145, %v162
    %164 = vst.msk [vmem:[#allocation4] sm:$0x1] %vm128, %v163
    // Predicated region
    $region14: #{tpu_custom_call.1} parent=1 // pred_check
      %p165 = pneg %p12
    $region15: #{tpu_custom_call.1} parent=1 // pred_check_branch
      %167 = sbr.rel (%p165) target = $region17
    $region16: #{tpu_custom_call.1} parent=1 // pred_region
      %v168 = vld [vmem:[#allocation2] sm:$0x1]
      %v169 = vrcp.pop 3072.0
      %v170 = vmul.f32 %v168, %v169
      %v171 = vld [vmem:[#allocation3] sm:$0x1]
      %v172 = vld [vmem:[#allocation4] sm:$0x1]
      %v173 = vrcp.pop %v172
      %v174 = vmul.f32 %v171, %v173
      %v175 = vmul.f32 %v170, 0.1
      %v176 = vmul.f32 %v174, 0.9
      %v177 = vadd.f32 %v175, %v176
      %178 = vst.msk [vmem:[#allocation5] sm:$0x1] %vm128, %v177
    $region17: #{tpu_custom_call.1} parent=1 // pred_fallthru
      _
    // Predicated region
    $region18: #{tpu_custom_call.1} parent=1 // pred_check
      _
    $region19: #{tpu_custom_call.1} parent=1 // pred_check_branch
      %180 = sbr.rel (0) target = $region21
    $region20: #{tpu_custom_call.1} parent=1 // pred_region
      %s182 = ssub.s32 16, 16
      %183 = vsyncadd [#allocation6], %s182
      %s185 = sshll.u32 [#allocation5], 4
      %s186 = int_to_ptr.vmem [resolvable:$true] %s185
      %188 = dma.vmem_to_hbm [thread:$0]  %s186, 16, %s2, [#allocation6]
    $region21: #{tpu_custom_call.1} parent=1 // pred_fallthru
      _
    // Predicated region
    $region22: #{tpu_custom_call.1} parent=1 // pred_check
      _
    $region23: #{tpu_custom_call.1} parent=1 // pred_check_branch
      %190 = sbr.rel (0) target = $region25
    $region24: #{tpu_custom_call.1} parent=1 // pred_region
      %191 = dma.done [#allocation6], 16
    $region25: #{tpu_custom_call.1} parent=1 // pred_fallthru
      _
    %192 = vsyncpa [#allocation6], 1

</llo_original>
